<compile_context>
chip_gen: v7x
topology: tpu7x:2x2x1
jax: 0.10.0
libtpu: 0.0.40
codegen_flags: <defaults>
</compile_context>

<pallas_src>
import functools

import jax
import jax.numpy as jnp
from jax.experimental import pallas as pl
from jax.experimental.pallas import tpu as pltpu


def _round_up(x, m):
    return ((x + m - 1) // m) * m


def _tpu_hw_params():
    """Best-effort (vmem_capacity_bytes, mxu_align); conservative fallbacks."""
    kind = ""
    try:
        kind = jax.devices()[0].device_kind.lower()
    except Exception:
        pass
    vmem_cap = 64 << 20  # v7x floor — safe on every generation
    try:
        vmem_cap = int(pltpu.get_tpu_info().vmem_capacity_bytes)
    except Exception:
        if kind and "7" not in kind:
            vmem_cap = 128 << 20  # v2..v6 parts: 128 MiB VMEM per core
    if "7" in kind:
        vmem_cap = min(vmem_cap, 64 << 20)  # v7x: 64 MiB per TensorCore
    # v6e/v7x MXU is 2x256x256 -> 256 alignment; 128 is optimal on v5e/older.
    align = 128 if any(t in kind for t in ("v2", "v3", "v4", "v5")) else 256
    return vmem_cap, align


def _apply_activation(h, activation):
    if activation == "relu":
        return jnp.maximum(h, 0.0)
    # PyTorch nn.GELU / F.gelu default is the exact erf formulation.
    return jax.nn.gelu(h, approximate=False)


# --------------------------------------------------------------------------
# Kernels
# --------------------------------------------------------------------------
def ffn_resident_kernel(x_ref, w1_ref, b1_ref, w2_ref, b2_ref, o_ref, *,
                        activation):
    """Weight-resident path: full W1/W2 live in VMEM, grid streams row tiles."""
    h = jnp.dot(x_ref[...], w1_ref[...], preferred_element_type=jnp.float32)
    h = _apply_activation(h + b1_ref[...], activation)
    # TODO(synk): train-mode dropout (p) omitted; eval-mode dropout is identity.
    y = jnp.dot(h.astype(w2_ref.dtype), w2_ref[...],
                preferred_element_type=jnp.float32) + b2_ref[...]
    o_ref[...] = y.astype(o_ref.dtype)


def ffn_ktiled_kernel(x_ref, w1_ref, b1_ref, w2_ref, b2_ref, o_ref, acc_ref, *,
                      activation):
    """Fallback path: hidden dim tiled on a reduction grid axis (last)."""
    k = pl.program_id(1)

    @pl.when(k == 0)
    def _init():
        # Fold the second bias into the accumulator init (fused epilogue).
        acc_ref[...] = jnp.broadcast_to(b2_ref[...], acc_ref.shape)

    h = jnp.dot(x_ref[...], w1_ref[...], preferred_element_type=jnp.float32)
    h = _apply_activation(h + b1_ref[...], activation)
    # TODO(synk): train-mode dropout (p) omitted; eval-mode dropout is identity.
    acc_ref[...] += jnp.dot(h.astype(w2_ref.dtype), w2_ref[...],
                            preferred_element_type=jnp.float32)

    @pl.when(k == pl.num_programs(1) - 1)
    def _finalize():
        o_ref[...] = acc_ref[...].astype(o_ref.dtype)


# --------------------------------------------------------------------------
# Planning (host-side Python, cheap)
# --------------------------------------------------------------------------
def _plan(size_p, hid_p, compute_dtype, out_dtype, block_rows, block_hidden,
          align, vmem_cap, force_ktiled=False):
    budget = int(vmem_cap * 0.8)  # headroom for Mosaic internals/semaphores
    csz = jnp.dtype(compute_dtype).itemsize
    osz = jnp.dtype(out_dtype).itemsize
    weight_bytes = 2 * size_p * hid_p * csz + (hid_p + size_p) * 4

    def resident_est(tm):
        return (2 * weight_bytes              # W1+W2+biases (allow 2 buffers)
                + 2 * tm * size_p * csz       # x tiles (double-buffered)
                + 2 * tm * size_p * osz       # output tiles
                + tm * hid_p * 4              # f32 intermediate h
                + tm * size_p * 4)            # f32 epilogue temp

    def ktiled_est(tm, th):
        return (2 * tm * size_p * csz         # x tiles
                + 2 * size_p * th * csz       # W1 slices
                + 2 * th * size_p * csz       # W2 slices
                + 2 * (th + size_p) * 4       # biases
                + 2 * tm * size_p * osz       # output tiles
                + tm * size_p * 4             # f32 accumulator scratch
                + tm * th * 4)                # f32 intermediate h

    if not force_ktiled:
        for tm in sorted({block_rows, 256, 128}, reverse=True):
            if tm > block_rows:
                continue
            est = resident_est(tm)
            if est <= budget:
                return dict(resident=True, tm_cap=tm, th=None,
                            vmem_limit=int(min(max(1.5 * est, 16 << 20), budget)))

    # k-tiled fallback: pick th as a dividing multiple of `align` (no round-up
    # inflation of the hidden dim).
    tm = block_rows
    th = max((min(block_hidden, hid_p) // align) * align, align)
    while hid_p % th:
        th -= align
    while ktiled_est(tm, th) > budget and th > align:
        th -= align
        while hid_p % th:
            th -= align
    while ktiled_est(tm, th) > budget and tm > 128:
        tm //= 2
    est = ktiled_est(tm, th)
    return dict(resident=False, tm_cap=tm, th=th,
                vmem_limit=int(min(max(1.5 * est, 16 << 20), budget)))


# --------------------------------------------------------------------------
# Jitted forward on flattened rows
# --------------------------------------------------------------------------
@functools.partial(
    jax.jit,
    static_argnames=("tm_cap", "th", "resident", "activation",
                     "compute_dtype", "out_dtype", "vmem_limit"))
def _ffn_forward_2d(x2d, w1p, b1p, w2p, b2p, *, tm_cap, th, resident,
                    activation, compute_dtype, out_dtype, vmem_limit):
    compute_dtype = jnp.dtype(compute_dtype)
    out_dtype = jnp.dtype(out_dtype)
    M, size = x2d.shape
    size_p, hid_p = w1p.shape

    tm = min(tm_cap, _round_up(M, 128))
    n_row = -(-M // tm)
    if n_row > 1 and n_row % 2:
        n_row += 1  # even row-tile count -> clean 2-TC split on v7x megacore
    Mp = n_row * tm

    if (M, size) == (Mp, size_p) and x2d.dtype == compute_dtype:
        xp = x2d  # already aligned: skip the padded copy entirely
    else:
        xp = jnp.zeros((Mp, size_p), compute_dtype).at[:M, :size].set(
            x2d.astype(compute_dtype))

    if resident:
        kernel = functools.partial(ffn_resident_kernel, activation=activation)
        out = pl.pallas_call(
            kernel,
            out_shape=jax.ShapeDtypeStruct((Mp, size_p), out_dtype),
            grid_spec=pltpu.PrefetchScalarGridSpec(
                num_scalar_prefetch=0,
                grid=(Mp // tm,),
                in_specs=[
                    pl.BlockSpec((tm, size_p), lambda i: (i, 0)),      # x rows
                    pl.BlockSpec((size_p, hid_p), lambda i: (0, 0)),   # W1 (resident)
                    pl.BlockSpec((1, hid_p), lambda i: (0, 0)),        # b1
                    pl.BlockSpec((hid_p, size_p), lambda i: (0, 0)),   # W2 (resident)
                    pl.BlockSpec((1, size_p), lambda i: (0, 0)),       # b2
                ],
                out_specs=pl.BlockSpec((tm, size_p), lambda i: (i, 0)),
            ),
            compiler_params=pltpu.CompilerParams(
                dimension_semantics=("parallel",),
                vmem_limit_bytes=vmem_limit,
            ),
        )(xp, w1p, b1p, w2p, b2p)
    else:
        kernel = functools.partial(ffn_ktiled_kernel, activation=activation)
        out = pl.pallas_call(
            kernel,
            out_shape=jax.ShapeDtypeStruct((Mp, size_p), out_dtype),
            grid_spec=pltpu.PrefetchScalarGridSpec(
                num_scalar_prefetch=0,
                grid=(Mp // tm, hid_p // th),          # reduction axis last
                in_specs=[
                    pl.BlockSpec((tm, size_p), lambda i, k: (i, 0)),   # x rows
                    pl.BlockSpec((size_p, th), lambda i, k: (0, k)),   # W1 col slice
                    pl.BlockSpec((1, th), lambda i, k: (0, k)),        # b1 slice
                    pl.BlockSpec((th, size_p), lambda i, k: (k, 0)),   # W2 row slice
                    pl.BlockSpec((1, size_p), lambda i, k: (0, 0)),    # b2 (tiny)
                ],
                out_specs=pl.BlockSpec((tm, size_p), lambda i, k: (i, 0)),
                scratch_shapes=[pltpu.VMEM((tm, size_p), jnp.float32)],
            ),
            compiler_params=pltpu.CompilerParams(
                dimension_semantics=("parallel", "arbitrary"),
                vmem_limit_bytes=vmem_limit,
            ),
        )(xp, w1p, b1p, w2p, b2p)

    if (Mp, size_p) != (M, size):
        out = out[:M, :size]
    return out


# --------------------------------------------------------------------------
# Public API
# --------------------------------------------------------------------------
def make_positionwise_ffn(w1, b1, w2, b2, *, block_rows=512, block_hidden=2048,
                          compute_dtype=jnp.bfloat16, activation="relu",
                          out_dtype=None, force_ktiled=False):
    """Pre-pads/casts the weights once and returns `apply(x)`.

    w1: (size, hidden), b1: (hidden,), w2: (hidden, size), b2: (size,)
    apply(x): (..., size) -> (..., size)
    """
    if activation not in ("relu", "gelu"):
        raise ValueError(f"unsupported activation: {activation}")
    size, hidden = w1.shape
    cdt = jnp.dtype(compute_dtype)
    vmem_cap, align = _tpu_hw_params()
    size_p = _round_up(size, align)
    hid_p = _round_up(hidden, align)

    # Hoisted operand prep: padded, compute-dtype weights built exactly once.
    # Zero rows/cols are harmless: relu/gelu(0)=0 and zero W2 rows add 0.
    w1p = jnp.zeros((size_p, hid_p), cdt).at[:size, :hidden].set(
        jnp.asarray(w1, cdt))
    b1p = jnp.zeros((1, hid_p), jnp.float32).at[0, :hidden].set(
        jnp.asarray(b1, jnp.float32))
    w2p = jnp.zeros((hid_p, size_p), cdt).at[:hidden, :size].set(
        jnp.asarray(w2, cdt))
    b2p = jnp.zeros((1, size_p), jnp.float32).at[0, :size].set(
        jnp.asarray(b2, jnp.float32))

    def apply(x):
        odt = jnp.dtype(out_dtype) if out_dtype is not None else jnp.dtype(x.dtype)
        plan = _plan(size_p, hid_p, cdt, odt, block_rows, block_hidden,
                     align, vmem_cap, force_ktiled=force_ktiled)
        x2d = x.reshape(-1, size)
        y2d = _ffn_forward_2d(
            x2d, w1p, b1p, w2p, b2p,
            tm_cap=plan["tm_cap"], th=plan["th"], resident=plan["resident"],
            activation=activation, compute_dtype=cdt.name, out_dtype=odt.name,
            vmem_limit=plan["vmem_limit"])
        return y2d.reshape(x.shape)

    return apply


def positionwise_ffn(x, w1, b1, w2, b2, **kwargs):
    """One-shot convenience wrapper (prefer make_positionwise_ffn for reuse)."""
    return make_positionwise_ffn(w1, b1, w2, b2, **kwargs)(x)


def reference_ffn(x, w1, b1, w2, b2, activation="relu"):
    h = x @ w1 + b1
    h = jnp.maximum(h, 0.0) if activation == "relu" else jax.nn.gelu(
        h, approximate=False)
    return h @ w2 + b2


if __name__ == "__main__":
    # Small deterministic example: batch=2, seq=8, size=32, hidden=64
    batch, seq, size, hidden = 2, 8, 32, 64

    key = jax.random.PRNGKey(0)
    kx, kw1, kb1, kw2, kb2 = jax.random.split(key, 5)

    x = jax.random.normal(kx, (batch, seq, size), dtype=jnp.float32)
    # nn.Linear(size, hidden) / nn.Linear(hidden, size), stored (in, out).
    w1 = jax.random.normal(kw1, (size, hidden), jnp.float32) * (1.0 / size ** 0.5)
    b1 = jax.random.normal(kb1, (hidden,), jnp.float32) * 0.01
    w2 = jax.random.normal(kw2, (hidden, size), jnp.float32) * (1.0 / hidden ** 0.5)
    b2 = jax.random.normal(kb2, (size,), jnp.float32) * 0.01

    y_ref = reference_ffn(x, w1, b1, w2, b2)

    # f32 exactness on the weight-resident fast path (built once, reused).
    ffn_f32 = make_positionwise_ffn(w1, b1, w2, b2, compute_dtype=jnp.float32)
    y_f32 = jax.block_until_ready(ffn_f32(x))
    assert y_f32.shape == x.shape
    assert jnp.allclose(y_f32, y_ref, atol=1e-5, rtol=1e-5), "f32 resident mismatch"

    # Ragged row count (tests pad-and-slice tail handling).
    x_odd = jax.random.normal(kx, (3, 5, size), dtype=jnp.float32)
    y_odd = jax.block_until_ready(ffn_f32(x_odd))
    assert jnp.allclose(y_odd, reference_ffn(x_odd, w1, b1, w2, b2),
                        atol=1e-5, rtol=1e-5), "ragged-M mismatch"

    # Forced k-tiled fallback path (large-weight code path) must agree too.
    ffn_kt = make_positionwise_ffn(w1, b1, w2, b2, compute_dtype=jnp.float32,
                                   force_ktiled=True)
    y_kt = jax.block_until_ready(ffn_kt(x))
    assert jnp.allclose(y_kt, y_ref, atol=1e-5, rtol=1e-5), "k-tiled mismatch"

    # GELU path (exact erf, PyTorch nn.GELU default).
    ffn_gelu = make_positionwise_ffn(w1, b1, w2, b2, compute_dtype=jnp.float32,
                                     activation="gelu")
    y_g = jax.block_until_ready(ffn_gelu(x))
    assert jnp.allclose(y_g, reference_ffn(x, w1, b1, w2, b2, activation="gelu"),
                        atol=1e-5, rtol=1e-5), "gelu mismatch"

    # Default fast path: bf16 weights/activations, f32 accumulation.
    ffn_bf16 = make_positionwise_ffn(w1, b1, w2, b2)
    y_bf16 = jax.block_until_ready(ffn_bf16(x))
    assert y_bf16.shape == x.shape
    err = jnp.max(jnp.abs(y_bf16 - y_ref))
    scale = jnp.maximum(jnp.max(jnp.abs(y_ref)), 1.0)
    assert err <= 0.05 * scale, f"bf16 path error too large: {err}"

    print("KERNEL_OK")
</pallas_src>

<mosaic_0001>
module attributes {stable_mosaic.version = 11 : i64} {
  func.func @ffn_resident_kernel(%arg0: i32, %arg1: memref<128x256xf32, #tpu.memory_space<vmem>>, %arg2: memref<256x256xf32, #tpu.memory_space<vmem>>, %arg3: memref<1x256xf32, #tpu.memory_space<vmem>>, %arg4: memref<256x256xf32, #tpu.memory_space<vmem>>, %arg5: memref<1x256xf32, #tpu.memory_space<vmem>>, %arg6: memref<128x256xf32, #tpu.memory_space<vmem>>) attributes {dimension_semantics = [#tpu.dimension_semantics<parallel>], iteration_bounds = array<i64: 1>, scalar_prefetch = 0 : i64, scratch_operands = 0 : i64, tpu.core_type = #tpu.core_type<tc>, window_params = [{transform_indices = @transform_0, window_bounds = array<i64: 128, 256>}, {pipeline_mode = #tpu.pipeline_mode<synchronous>, transform_indices = @transform_1, window_bounds = array<i64: 256, 256>}, {pipeline_mode = #tpu.pipeline_mode<synchronous>, transform_indices = @transform_2, window_bounds = array<i64: 1, 256>}, {pipeline_mode = #tpu.pipeline_mode<synchronous>, transform_indices = @transform_3, window_bounds = array<i64: 256, 256>}, {pipeline_mode = #tpu.pipeline_mode<synchronous>, transform_indices = @transform_4, window_bounds = array<i64: 1, 256>}, {transform_indices = @transform_5, window_bounds = array<i64: 128, 256>}]} {
    %c0 = arith.constant 0 : index
    %c0_0 = arith.constant 0 : index
    %0 = vector.load %arg1[%c0, %c0_0] : memref<128x256xf32, #tpu.memory_space<vmem>>, vector<128x256xf32>
    %c0_1 = arith.constant 0 : index
    %c0_2 = arith.constant 0 : index
    %1 = vector.load %arg2[%c0_1, %c0_2] : memref<256x256xf32, #tpu.memory_space<vmem>>, vector<256x256xf32>
    %cst = arith.constant dense<0.000000e+00> : vector<128x256xf32>
    %2 = tpu.matmul %0, %1, %cst {dimension_numbers = #tpu.dot_dimension_numbers<[1], [0], [0], [1], [0, 0, 1, 1], [], []>} : vector<128x256xf32>, vector<256x256xf32>, vector<128x256xf32> -> vector<128x256xf32>
    %c0_3 = arith.constant 0 : index
    %c0_4 = arith.constant 0 : index
    %3 = vector.load %arg3[%c0_3, %c0_4] : memref<1x256xf32, #tpu.memory_space<vmem>>, vector<1x256xf32>
    %4 = vector.broadcast %3 : vector<1x256xf32> to vector<128x256xf32>
    %5 = arith.addf %2, %4 : vector<128x256xf32>
    %cst_5 = arith.constant 0.000000e+00 : f32
    %6 = vector.broadcast %cst_5 : f32 to vector<128x256xf32>
    %7 = arith.maximumf %5, %6 : vector<128x256xf32>
    %c0_6 = arith.constant 0 : index
    %c0_7 = arith.constant 0 : index
    %8 = vector.load %arg4[%c0_6, %c0_7] : memref<256x256xf32, #tpu.memory_space<vmem>>, vector<256x256xf32>
    %cst_8 = arith.constant dense<0.000000e+00> : vector<128x256xf32>
    %9 = tpu.matmul %7, %8, %cst_8 {dimension_numbers = #tpu.dot_dimension_numbers<[1], [0], [0], [1], [0, 0, 1, 1], [], []>} : vector<128x256xf32>, vector<256x256xf32>, vector<128x256xf32> -> vector<128x256xf32>
    %c0_9 = arith.constant 0 : index
    %c0_10 = arith.constant 0 : index
    %10 = vector.load %arg5[%c0_9, %c0_10] : memref<1x256xf32, #tpu.memory_space<vmem>>, vector<1x256xf32>
    %11 = vector.broadcast %10 : vector<1x256xf32> to vector<128x256xf32>
    %12 = arith.addf %9, %11 : vector<128x256xf32>
    %c0_11 = arith.constant 0 : index
    %c0_12 = arith.constant 0 : index
    %13 = vector.load %arg6[%c0_11, %c0_12] : memref<128x256xf32, #tpu.memory_space<vmem>>, vector<128x256xf32>
    tpu.vector_store %arg6[%c0_11, %c0_12], %12 {strides = array<i32>} : memref<128x256xf32, #tpu.memory_space<vmem>>, vector<128x256xf32>,
    return
  }
  func.func @transform_0(%arg0: i32) -> (i32, i32) {
    %c0_i32 = arith.constant 0 : i32
    %c0_i32_0 = arith.constant 0 : i32
    return %arg0, %c0_i32 : i32, i32
  }
  func.func @transform_1(%arg0: i32) -> (i32, i32) {
    %c0_i32 = arith.constant 0 : i32
    %c0_i32_0 = arith.constant 0 : i32
    %c0_i32_1 = arith.constant 0 : i32
    return %c0_i32, %c0_i32_0 : i32, i32
  }
  func.func @transform_2(%arg0: i32) -> (i32, i32) {
    %c0_i32 = arith.constant 0 : i32
    %c0_i32_0 = arith.constant 0 : i32
    %c0_i32_1 = arith.constant 0 : i32
    return %c0_i32, %c0_i32_0 : i32, i32
  }
  func.func @transform_3(%arg0: i32) -> (i32, i32) {
    %c0_i32 = arith.constant 0 : i32
    %c0_i32_0 = arith.constant 0 : i32
    %c0_i32_1 = arith.constant 0 : i32
    return %c0_i32, %c0_i32_0 : i32, i32
  }
  func.func @transform_4(%arg0: i32) -> (i32, i32) {
    %c0_i32 = arith.constant 0 : i32
    %c0_i32_0 = arith.constant 0 : i32
    %c0_i32_1 = arith.constant 0 : i32
    return %c0_i32, %c0_i32_0 : i32, i32
  }
  func.func @transform_5(%arg0: i32) -> (i32, i32) {
    %c0_i32 = arith.constant 0 : i32
    %c0_i32_0 = arith.constant 0 : i32
    return %arg0, %c0_i32 : i32, i32
  }
}

</mosaic_0001>

<llo_original>
// kernel: _ffn_forward_2d.1
$region0: #{_ffn_forward_2d.1}
  #allocation0 [shape = 'u32[]', space=smem, size = 0x4, offset = 0x4, fixed_abs, tag = 'smem constant byte address 0x4 - core index']
  #allocation1 [shape = 'u32[144,128]{1,0:T(1,128)}', space=vmem, size = 0x12000, scoped, tag = 'internal scratch']
  %s0 = inlined_call_operand.vmem [shape: f32[128,256], index: 0, kind: input, shape index: {}]
  %s1 = inlined_call_operand.hbm [shape: f32[256,256], index: 1, kind: input, shape index: {}]
  %s2 = inlined_call_operand.vmem [shape: f32[1,256], index: 2, kind: input, shape index: {}]
  %s3 = inlined_call_operand.hbm [shape: f32[256,256], index: 3, kind: input, shape index: {}]
  %s4 = inlined_call_operand.vmem [shape: f32[1,256], index: 4, kind: input, shape index: {}]
  %s5 = inlined_call_operand.vmem [shape: f32[128,256], index: 5, kind: output, shape index: {}]
  %s6 = sld [smem:[#allocation0]]
  $region38: #{_ffn_forward_2d.1} parent=0
    _
  %s8 = ssub.s32 1, %s6
  %s9 = scalar_select 0, %s8, %s6
  $region1: #{_ffn_forward_2d.1} parent=0
    #allocation2 [shape = 'u8[262144]{0}', space=vmem, size = 0x40000, scoped, tag = 'input window, operand 1, single buffered']
    #allocation3 [shape = 's32[1]{0}', space=sflag, size = 0x4, scoped, tag = 'scoped memory for _ffn_forward_2d.1']
    #allocation4 [shape = 'u8[262144]{0}', space=vmem, size = 0x40000, scoped, tag = 'input window, operand 3, single buffered']
    #allocation5 [shape = 's32[1]{0}', space=sflag, size = 0x4, scoped, tag = 'scoped memory for _ffn_forward_2d.1']
    %10 = vsyncpa [#allocation3], 0
    %11 = vsyncpa [#allocation5], 0
    // Predicated region
    $region2: #{_ffn_forward_2d.1} parent=1 // pred_check
      _
    $region3: #{_ffn_forward_2d.1} parent=1 // pred_check_branch
      %13 = sbr.rel (0) target = $region5
    $region4: #{_ffn_forward_2d.1} parent=1 // pred_region
      _
    $region5: #{_ffn_forward_2d.1} parent=1 // pred_fallthru
      _
    // Predicated region
    $region6: #{_ffn_forward_2d.1} parent=1 // pred_check
      _
    $region7: #{_ffn_forward_2d.1} parent=1 // pred_check_branch
      %15 = sbr.rel (0) target = $region9
    $region8: #{_ffn_forward_2d.1} parent=1 // pred_region
      %s17 = ssub.s32 8192, 8192
      %18 = vsyncadd [#allocation3], %s17
      %s19 = sshll.u32 [#allocation2], 4
      %s20 = int_to_ptr.vmem [resolvable:$true] %s19
      %25 = dma.hbm_to_vmem [thread:$0]  %s1, 8192, %s20, [#allocation3], 256, 256, 16
    $region9: #{_ffn_forward_2d.1} parent=1 // pred_fallthru
      _
    // Predicated region
    $region10: #{_ffn_forward_2d.1} parent=1 // pred_check
      _
    $region11: #{_ffn_forward_2d.1} parent=1 // pred_check_branch
      %27 = sbr.rel (0) target = $region13
    $region12: #{_ffn_forward_2d.1} parent=1 // pred_region
      _
    $region13: #{_ffn_forward_2d.1} parent=1 // pred_fallthru
      _
    // Predicated region
    $region14: #{_ffn_forward_2d.1} parent=1 // pred_check
      _
    $region15: #{_ffn_forward_2d.1} parent=1 // pred_check_branch
      %29 = sbr.rel (0) target = $region17
    $region16: #{_ffn_forward_2d.1} parent=1 // pred_region
      %s31 = ssub.s32 8192, 8192
      %32 = vsyncadd [#allocation5], %s31
      %s33 = sshll.u32 [#allocation4], 4
      %s34 = int_to_ptr.vmem [resolvable:$true] %s33
      %39 = dma.hbm_to_vmem [thread:$0]  %s3, 8192, %s34, [#allocation5], 256, 256, 16
    $region17: #{_ffn_forward_2d.1} parent=1 // pred_fallthru
      _
    // Predicated region
    $region18: #{_ffn_forward_2d.1} parent=1 // pred_check
      _
    $region19: #{_ffn_forward_2d.1} parent=1 // pred_check_branch
      %41 = sbr.rel (0) target = $region21
    $region20: #{_ffn_forward_2d.1} parent=1 // pred_region
      _
    $region21: #{_ffn_forward_2d.1} parent=1 // pred_fallthru
      _
    // Predicated region
    $region22: #{_ffn_forward_2d.1} parent=1 // pred_check
      _
    $region23: #{_ffn_forward_2d.1} parent=1 // pred_check_branch
      %43 = sbr.rel (0) target = $region25
    $region24: #{_ffn_forward_2d.1} parent=1 // pred_region
      %44 = dma.done [#allocation3], 8192
    $region25: #{_ffn_forward_2d.1} parent=1 // pred_fallthru
      _
    // Predicated region
    $region26: #{_ffn_forward_2d.1} parent=1 // pred_check
      _
    $region27: #{_ffn_forward_2d.1} parent=1 // pred_check_branch
      %46 = sbr.rel (0) target = $region29
    $region28: #{_ffn_forward_2d.1} parent=1 // pred_region
      %47 = dma.done [#allocation5], 8192
    $region29: #{_ffn_forward_2d.1} parent=1 // pred_fallthru
      _
    %v48 = vld [vmem:[%s0] sm:$0xff]
    %v49 = vld [vmem:[%s0 + $0x8] sm:$0xff]
    %v50 = vld [vmem:[%s0 + $0x10] sm:$0xff]
    %v51 = vld [vmem:[%s0 + $0x18] sm:$0xff]
    %v52 = vld [vmem:[%s0 + $0x20] sm:$0xff]
    %v53 = vld [vmem:[%s0 + $0x28] sm:$0xff]
    %v54 = vld [vmem:[%s0 + $0x30] sm:$0xff]
    %v55 = vld [vmem:[%s0 + $0x38] sm:$0xff]
    %v56 = vld [vmem:[%s0 + $0x40] sm:$0xff]
    %v57 = vld [vmem:[%s0 + $0x48] sm:$0xff]
    %v58 = vld [vmem:[%s0 + $0x50] sm:$0xff]
    %v59 = vld [vmem:[%s0 + $0x58] sm:$0xff]
    %v60 = vld [vmem:[%s0 + $0x60] sm:$0xff]
    %v61 = vld [vmem:[%s0 + $0x68] sm:$0xff]
    %v62 = vld [vmem:[%s0 + $0x70] sm:$0xff]
    %v63 = vld [vmem:[%s0 + $0x78] sm:$0xff]
    %v64 = vld [vmem:[%s0 + $0x80] sm:$0xff]
    %v65 = vld [vmem:[%s0 + $0x88] sm:$0xff]
    %v66 = vld [vmem:[%s0 + $0x90] sm:$0xff]
    %v67 = vld [vmem:[%s0 + $0x98] sm:$0xff]
    %v68 = vld [vmem:[%s0 + $0xa0] sm:$0xff]
    %v69 = vld [vmem:[%s0 + $0xa8] sm:$0xff]
    %v70 = vld [vmem:[%s0 + $0xb0] sm:$0xff]
    %v71 = vld [vmem:[%s0 + $0xb8] sm:$0xff]
    %v72 = vld [vmem:[%s0 + $0xc0] sm:$0xff]
    %v73 = vld [vmem:[%s0 + $0xc8] sm:$0xff]
    %v74 = vld [vmem:[%s0 + $0xd0] sm:$0xff]
    %v75 = vld [vmem:[%s0 + $0xd8] sm:$0xff]
    %v76 = vld [vmem:[%s0 + $0xe0] sm:$0xff]
    %v77 = vld [vmem:[%s0 + $0xe8] sm:$0xff]
    %v78 = vld [vmem:[%s0 + $0xf0] sm:$0xff]
    %v79 = vld [vmem:[%s0 + $0xf8] sm:$0xff]
    %v80 = vld [vmem:[#allocation2] sm:$0xff]
    %v81 = vld [vmem:[#allocation2 + $0x8] sm:$0xff]
    %v82 = vld [vmem:[#allocation2 + $0x10] sm:$0xff]
    %v83 = vld [vmem:[#allocation2 + $0x18] sm:$0xff]
    %v84 = vld [vmem:[#allocation2 + $0x20] sm:$0xff]
    %v85 = vld [vmem:[#allocation2 + $0x28] sm:$0xff]
    %v86 = vld [vmem:[#allocation2 + $0x30] sm:$0xff]
    %v87 = vld [vmem:[#allocation2 + $0x38] sm:$0xff]
    %v88 = vld [vmem:[#allocation2 + $0x40] sm:$0xff]
    %v89 = vld [vmem:[#allocation2 + $0x48] sm:$0xff]
    %v90 = vld [vmem:[#allocation2 + $0x50] sm:$0xff]
    %v91 = vld [vmem:[#allocation2 + $0x58] sm:$0xff]
    %v92 = vld [vmem:[#allocation2 + $0x60] sm:$0xff]
    %v93 = vld [vmem:[#allocation2 + $0x68] sm:$0xff]
    %v94 = vld [vmem:[#allocation2 + $0x70] sm:$0xff]
    %v95 = vld [vmem:[#allocation2 + $0x78] sm:$0xff]
    %v96 = vld [vmem:[#allocation2 + $0x80] sm:$0xff]
    %v97 = vld [vmem:[#allocation2 + $0x88] sm:$0xff]
    %v98 = vld [vmem:[#allocation2 + $0x90] sm:$0xff]
    %v99 = vld [vmem:[#allocation2 + $0x98] sm:$0xff]
    %v100 = vld [vmem:[#allocation2 + $0xa0] sm:$0xff]
    %v101 = vld [vmem:[#allocation2 + $0xa8] sm:$0xff]
    %v102 = vld [vmem:[#allocation2 + $0xb0] sm:$0xff]
    %v103 = vld [vmem:[#allocation2 + $0xb8] sm:$0xff]
    %v104 = vld [vmem:[#allocation2 + $0xc0] sm:$0xff]
    %v105 = vld [vmem:[#allocation2 + $0xc8] sm:$0xff]
    %v106 = vld [vmem:[#allocation2 + $0xd0] sm:$0xff]
    %v107 = vld [vmem:[#allocation2 + $0xd8] sm:$0xff]
    %v108 = vld [vmem:[#allocation2 + $0xe0] sm:$0xff]
    %v109 = vld [vmem:[#allocation2 + $0xe8] sm:$0xff]
    %v110 = vld [vmem:[#allocation2 + $0xf0] sm:$0xff]
    %v111 = vld [vmem:[#allocation2 + $0xf8] sm:$0xff]
    %v112 = vld [vmem:[#allocation2 + $0x100] sm:$0xff]
    %v113 = vld [vmem:[#allocation2 + $0x108] sm:$0xff]
    %v114 = vld [vmem:[#allocation2 + $0x110] sm:$0xff]
    %v115 = vld [vmem:[#allocation2 + $0x118] sm:$0xff]
    %v116 = vld [vmem:[#allocation2 + $0x120] sm:$0xff]
    %v117 = vld [vmem:[#allocation2 + $0x128] sm:$0xff]
    %v118 = vld [vmem:[#allocation2 + $0x130] sm:$0xff]
    %v119 = vld [vmem:[#allocation2 + $0x138] sm:$0xff]
    %v120 = vld [vmem:[#allocation2 + $0x140] sm:$0xff]
    %v121 = vld [vmem:[#allocation2 + $0x148] sm:$0xff]
    %v122 = vld [vmem:[#allocation2 + $0x150] sm:$0xff]
    %v123 = vld [vmem:[#allocation2 + $0x158] sm:$0xff]
    %v124 = vld [vmem:[#allocation2 + $0x160] sm:$0xff]
    %v125 = vld [vmem:[#allocation2 + $0x168] sm:$0xff]
    %v126 = vld [vmem:[#allocation2 + $0x170] sm:$0xff]
    %v127 = vld [vmem:[#allocation2 + $0x178] sm:$0xff]
    %v128 = vld [vmem:[#allocation2 + $0x180] sm:$0xff]
    %v129 = vld [vmem:[#allocation2 + $0x188] sm:$0xff]
    %v130 = vld [vmem:[#allocation2 + $0x190] sm:$0xff]
    %v131 = vld [vmem:[#allocation2 + $0x198] sm:$0xff]
    %v132 = vld [vmem:[#allocation2 + $0x1a0] sm:$0xff]
    %v133 = vld [vmem:[#allocation2 + $0x1a8] sm:$0xff]
    %v134 = vld [vmem:[#allocation2 + $0x1b0] sm:$0xff]
    %v135 = vld [vmem:[#allocation2 + $0x1b8] sm:$0xff]
    %v136 = vld [vmem:[#allocation2 + $0x1c0] sm:$0xff]
    %v137 = vld [vmem:[#allocation2 + $0x1c8] sm:$0xff]
    %v138 = vld [vmem:[#allocation2 + $0x1d0] sm:$0xff]
    %v139 = vld [vmem:[#allocation2 + $0x1d8] sm:$0xff]
    %v140 = vld [vmem:[#allocation2 + $0x1e0] sm:$0xff]
    %v141 = vld [vmem:[#allocation2 + $0x1e8] sm:$0xff]
    %v142 = vld [vmem:[#allocation2 + $0x1f0] sm:$0xff]
    %v143 = vld [vmem:[#allocation2 + $0x1f8] sm:$0xff]
    %v144 = vld [vmem:[%s2] sm:$0x3]
    %v146 = vlaneseq
    %v147 = vshrl.u32 %v146, 7
    %v148 = vsub.s32 0, %v147
    %v149 = vrot.slane %v144, %v148
    %v150 = vlaneseq
    %v151 = vshrl.u32 %v150, 7
    %v152 = vsub.s32 1, %v151
    %v153 = vrot.slane %v144, %v152
    %156 = vmatprep.subr.mxu0 %v81
    %157 = vmatpush1.msra.mxu0 %v80
    %158 = vmatprep.subr.mxu0 %v83
    %159 = vmatpush1.msra.mxu0 %v82
    %160 = vmatprep.subr.mxu0 %v85
    %161 = vmatpush1.msra.mxu0 %v84
    %162 = vmatprep.subr.mxu0 %v87
    %163 = vmatpush1.msra.mxu0 %v86
    %164 = vmatprep.subr.mxu0 %v89
    %165 = vmatpush1.msra.mxu0 %v88
    %166 = vmatprep.subr.mxu0 %v91
    %167 = vmatpush1.msra.mxu0 %v90
    %168 = vmatprep.subr.mxu0 %v93
    %169 = vmatpush1.msra.mxu0 %v92
    %170 = vmatprep.subr.mxu0 %v95
    %171 = vmatpush1.msra.mxu0 %v94
    %172 = vmatprep.subr.mxu0 %v97
    %173 = vmatpush1.msra.mxu0 %v96
    %174 = vmatprep.subr.mxu0 %v99
    %175 = vmatpush1.msra.mxu0 %v98
    %176 = vmatprep.subr.mxu0 %v101
    %177 = vmatpush1.msra.mxu0 %v100
    %178 = vmatprep.subr.mxu0 %v103
    %179 = vmatpush1.msra.mxu0 %v102
    %180 = vmatprep.subr.mxu0 %v105
    %181 = vmatpush1.msra.mxu0 %v104
    %182 = vmatprep.subr.mxu0 %v107
    %183 = vmatpush1.msra.mxu0 %v106
    %184 = vmatprep.subr.mxu0 %v109
    %185 = vmatpush1.msra.mxu0 %v108
    %186 = vmatprep.subr.mxu0 %v111
    %187 = vmatpush1.msra.mxu0 %v110
    %188 = vmatprep.subr.mxu0 %v113
    %189 = vmatpush1.msra.mxu0 %v112
    %190 = vmatprep.subr.mxu0 %v115
    %191 = vmatpush1.msra.mxu0 %v114
    %192 = vmatprep.subr.mxu0 %v117
    %193 = vmatpush1.msra.mxu0 %v116
    %194 = vmatprep.subr.mxu0 %v119
    %195 = vmatpush1.msra.mxu0 %v118
    %196 = vmatprep.subr.mxu0 %v121
    %197 = vmatpush1.msra.mxu0 %v120
    %198 = vmatprep.subr.mxu0 %v123
    %199 = vmatpush1.msra.mxu0 %v122
    %200 = vmatprep.subr.mxu0 %v125
    %201 = vmatpush1.msra.mxu0 %v124
    %202 = vmatprep.subr.mxu0 %v127
    %203 = vmatpush1.msra.mxu0 %v126
    %204 = vmatprep.subr.mxu0 %v129
    %205 = vmatpush1.msra.mxu0 %v128
    %206 = vmatprep.subr.mxu0 %v131
    %207 = vmatpush1.msra.mxu0 %v130
    %208 = vmatprep.subr.mxu0 %v133
    %209 = vmatpush1.msra.mxu0 %v132
    %210 = vmatprep.subr.mxu0 %v135
    %211 = vmatpush1.msra.mxu0 %v134
    %212 = vmatprep.subr.mxu0 %v137
    %213 = vmatpush1.msra.mxu0 %v136
    %214 = vmatprep.subr.mxu0 %v139
    %215 = vmatpush1.msra.mxu0 %v138
    %216 = vmatprep.subr.mxu0 %v141
    %217 = vmatpush1.msra.mxu0 %v140
    %218 = vmatprep.subr.mxu0 %v143
    %219 = vmatpush1.msra.mxu0 %v142
    %220 = vmatprep.mubr.f32.mxu0 %v49
    %221 = vmatmul.mubr.f32.gmra.mrb[0].mxu0 %v48
    %v222 = vpop.f32.mrb[0].mxu0
    %v223 = vadd.f32 %v149, %v222
    %v224 = vpop.f32.mrb[0].mxu0
    %v225 = vadd.f32 %v153, %v224
    %226 = vmatprep.mubr.f32.mxu0 %v51
    %227 = vmatmul.mubr.f32.gmra.mrb[0].mxu0 %v50
    %v228 = vpop.f32.mrb[0].mxu0
    %v229 = vadd.f32 %v149, %v228
    %v230 = vpop.f32.mrb[0].mxu0
    %v231 = vadd.f32 %v153, %v230
    %232 = vmatprep.mubr.f32.mxu0 %v53
    %233 = vmatmul.mubr.f32.gmra.mrb[0].mxu0 %v52
    %v234 = vpop.f32.mrb[0].mxu0
    %v235 = vadd.f32 %v149, %v234
    %v236 = vpop.f32.mrb[0].mxu0
    %v237 = vadd.f32 %v153, %v236
    %238 = vmatprep.mubr.f32.mxu0 %v55
    %239 = vmatmul.mubr.f32.gmra.mrb[0].mxu0 %v54
    %v240 = vpop.f32.mrb[0].mxu0
    %v241 = vadd.f32 %v149, %v240
    %v242 = vpop.f32.mrb[0].mxu0
    %v243 = vadd.f32 %v153, %v242
    %244 = vmatprep.mubr.f32.mxu0 %v57
    %245 = vmatmul.mubr.f32.gmra.mrb[0].mxu0 %v56
    %v246 = vpop.f32.mrb[0].mxu0
    %v247 = vadd.f32 %v149, %v246
    %v248 = vpop.f32.mrb[0].mxu0
    %v249 = vadd.f32 %v153, %v248
    %250 = vmatprep.mubr.f32.mxu0 %v59
    %251 = vmatmul.mubr.f32.gmra.mrb[0].mxu0 %v58
    %v252 = vpop.f32.mrb[0].mxu0
    %v253 = vadd.f32 %v149, %v252
    %v254 = vpop.f32.mrb[0].mxu0
    %v255 = vadd.f32 %v153, %v254
    %256 = vmatprep.mubr.f32.mxu0 %v61
    %257 = vmatmul.mubr.f32.gmra.mrb[0].mxu0 %v60
    %v258 = vpop.f32.mrb[0].mxu0
    %v259 = vadd.f32 %v149, %v258
    %v260 = vpop.f32.mrb[0].mxu0
    %v261 = vadd.f32 %v153, %v260
    %262 = vmatprep.mubr.f32.mxu0 %v63
    %263 = vmatmul.mubr.f32.gmra.mrb[0].mxu0 %v62
    %v264 = vpop.f32.mrb[0].mxu0
    %v265 = vadd.f32 %v149, %v264
    %v266 = vpop.f32.mrb[0].mxu0
    %v267 = vadd.f32 %v153, %v266
    %268 = vmatprep.mubr.f32.mxu0 %v65
    %269 = vmatmul.mubr.f32.gmra.mrb[0].mxu0 %v64
    %v270 = vpop.f32.mrb[0].mxu0
    %v271 = vadd.f32 %v149, %v270
    %v272 = vpop.f32.mrb[0].mxu0
    %v273 = vadd.f32 %v153, %v272
    %274 = vmatprep.mubr.f32.mxu0 %v67
    %275 = vmatmul.mubr.f32.gmra.mrb[0].mxu0 %v66
    %v276 = vpop.f32.mrb[0].mxu0
    %v277 = vadd.f32 %v149, %v276
    %v278 = vpop.f32.mrb[0].mxu0
    %v279 = vadd.f32 %v153, %v278
    %280 = vmatprep.mubr.f32.mxu0 %v69
    %281 = vmatmul.mubr.f32.gmra.mrb[0].mxu0 %v68
    %v282 = vpop.f32.mrb[0].mxu0
    %v283 = vadd.f32 %v149, %v282
    %v284 = vpop.f32.mrb[0].mxu0
    %v285 = vadd.f32 %v153, %v284
    %286 = vmatprep.mubr.f32.mxu0 %v71
    %287 = vmatmul.mubr.f32.gmra.mrb[0].mxu0 %v70
    %v288 = vpop.f32.mrb[0].mxu0
    %v289 = vadd.f32 %v149, %v288
    %v290 = vpop.f32.mrb[0].mxu0
    %v291 = vadd.f32 %v153, %v290
    %292 = vmatprep.mubr.f32.mxu0 %v73
    %293 = vmatmul.mubr.f32.gmra.mrb[0].mxu0 %v72
    %v294 = vpop.f32.mrb[0].mxu0
    %v295 = vadd.f32 %v149, %v294
    %v296 = vpop.f32.mrb[0].mxu0
    %v297 = vadd.f32 %v153, %v296
    %298 = vmatprep.mubr.f32.mxu0 %v75
    %299 = vmatmul.mubr.f32.gmra.mrb[0].mxu0 %v74
    %v300 = vpop.f32.mrb[0].mxu0
    %v301 = vadd.f32 %v149, %v300
    %v302 = vpop.f32.mrb[0].mxu0
    %v303 = vadd.f32 %v153, %v302
    %304 = vmatprep.mubr.f32.mxu0 %v77
    %305 = vmatmul.mubr.f32.gmra.mrb[0].mxu0 %v76
    %v306 = vpop.f32.mrb[0].mxu0
    %v307 = vadd.f32 %v149, %v306
    %v308 = vpop.f32.mrb[0].mxu0
    %v309 = vadd.f32 %v153, %v308
    %310 = vmatprep.mubr.f32.mxu0 %v79
    %311 = vmatmul.mubr.f32.gmra.mrb[0].mxu0 %v78
    %v312 = vpop.f32.mrb[0].mxu0
    %v313 = vadd.f32 %v149, %v312
    %v314 = vpop.f32.mrb[0].mxu0
    %v315 = vadd.f32 %v153, %v314
    %316 = vdwg.mxu0
    %v317 = vmax.f32 %v223, 0.0
    %v318 = vmax.f32 %v225, 0.0
    %v319 = vmax.f32 %v229, 0.0
    %v320 = vmax.f32 %v231, 0.0
    %v321 = vmax.f32 %v235, 0.0
    %v322 = vmax.f32 %v237, 0.0
    %v323 = vmax.f32 %v241, 0.0
    %v324 = vmax.f32 %v243, 0.0
    %v325 = vmax.f32 %v247, 0.0
    %v326 = vmax.f32 %v249, 0.0
    %v327 = vmax.f32 %v253, 0.0
    %v328 = vmax.f32 %v255, 0.0
    %v329 = vmax.f32 %v259, 0.0
    %v330 = vmax.f32 %v261, 0.0
    %v331 = vmax.f32 %v265, 0.0
    %v332 = vmax.f32 %v267, 0.0
    %v333 = vmax.f32 %v271, 0.0
    %v334 = vmax.f32 %v273, 0.0
    %v335 = vmax.f32 %v277, 0.0
    %v336 = vmax.f32 %v279, 0.0
    %v337 = vmax.f32 %v283, 0.0
    %v338 = vmax.f32 %v285, 0.0
    %v339 = vmax.f32 %v289, 0.0
    %v340 = vmax.f32 %v291, 0.0
    %v341 = vmax.f32 %v295, 0.0
    %v342 = vmax.f32 %v297, 0.0
    %v343 = vmax.f32 %v301, 0.0
    %v344 = vmax.f32 %v303, 0.0
    %v345 = vmax.f32 %v307, 0.0
    %v346 = vmax.f32 %v309, 0.0
    %v347 = vmax.f32 %v313, 0.0
    %v348 = vmax.f32 %v315, 0.0
    %v349 = vld [vmem:[#allocation4] sm:$0xff]
    %v350 = vld [vmem:[#allocation4 + $0x8] sm:$0xff]
    %v351 = vld [vmem:[#allocation4 + $0x10] sm:$0xff]
    %v352 = vld [vmem:[#allocation4 + $0x18] sm:$0xff]
    %v353 = vld [vmem:[#allocation4 + $0x20] sm:$0xff]
    %v354 = vld [vmem:[#allocation4 + $0x28] sm:$0xff]
    %v355 = vld [vmem:[#allocation4 + $0x30] sm:$0xff]
    %v356 = vld [vmem:[#allocation4 + $0x38] sm:$0xff]
    %v357 = vld [vmem:[#allocation4 + $0x40] sm:$0xff]
    %v358 = vld [vmem:[#allocation4 + $0x48] sm:$0xff]
    %v359 = vld [vmem:[#allocation4 + $0x50] sm:$0xff]
    %v360 = vld [vmem:[#allocation4 + $0x58] sm:$0xff]
    %v361 = vld [vmem:[#allocation4 + $0x60] sm:$0xff]
    %v362 = vld [vmem:[#allocation4 + $0x68] sm:$0xff]
    %v363 = vld [vmem:[#allocation4 + $0x70] sm:$0xff]
    %v364 = vld [vmem:[#allocation4 + $0x78] sm:$0xff]
    %v365 = vld [vmem:[#allocation4 + $0x80] sm:$0xff]
    %v366 = vld [vmem:[#allocation4 + $0x88] sm:$0xff]
    %v367 = vld [vmem:[#allocation4 + $0x90] sm:$0xff]
    %v368 = vld [vmem:[#allocation4 + $0x98] sm:$0xff]
    %v369 = vld [vmem:[#allocation4 + $0xa0] sm:$0xff]
    %v370 = vld [vmem:[#allocation4 + $0xa8] sm:$0xff]
    %v371 = vld [vmem:[#allocation4 + $0xb0] sm:$0xff]
    %v372 = vld [vmem:[#allocation4 + $0xb8] sm:$0xff]
    %v373 = vld [vmem:[#allocation4 + $0xc0] sm:$0xff]
    %v374 = vld [vmem:[#allocation4 + $0xc8] sm:$0xff]
    %v375 = vld [vmem:[#allocation4 + $0xd0] sm:$0xff]
    %v376 = vld [vmem:[#allocation4 + $0xd8] sm:$0xff]
    %v377 = vld [vmem:[#allocation4 + $0xe0] sm:$0xff]
    %v378 = vld [vmem:[#allocation4 + $0xe8] sm:$0xff]
    %v379 = vld [vmem:[#allocation4 + $0xf0] sm:$0xff]
    %v380 = vld [vmem:[#allocation4 + $0xf8] sm:$0xff]
    %v381 = vld [vmem:[#allocation4 + $0x100] sm:$0xff]
    %v382 = vld [vmem:[#allocation4 + $0x108] sm:$0xff]
    %v383 = vld [vmem:[#allocation4 + $0x110] sm:$0xff]
    %v384 = vld [vmem:[#allocation4 + $0x118] sm:$0xff]
    %v385 = vld [vmem:[#allocation4 + $0x120] sm:$0xff]
    %v386 = vld [vmem:[#allocation4 + $0x128] sm:$0xff]
    %v387 = vld [vmem:[#allocation4 + $0x130] sm:$0xff]
    %v388 = vld [vmem:[#allocation4 + $0x138] sm:$0xff]
    %v389 = vld [vmem:[#allocation4 + $0x140] sm:$0xff]
    %v390 = vld [vmem:[#allocation4 + $0x148] sm:$0xff]
    %v391 = vld [vmem:[#allocation4 + $0x150] sm:$0xff]
    %v392 = vld [vmem:[#allocation4 + $0x158] sm:$0xff]
    %v393 = vld [vmem:[#allocation4 + $0x160] sm:$0xff]
    %v394 = vld [vmem:[#allocation4 + $0x168] sm:$0xff]
    %v395 = vld [vmem:[#allocation4 + $0x170] sm:$0xff]
    %v396 = vld [vmem:[#allocation4 + $0x178] sm:$0xff]
    %v397 = vld [vmem:[#allocation4 + $0x180] sm:$0xff]
    %v398 = vld [vmem:[#allocation4 + $0x188] sm:$0xff]
    %v399 = vld [vmem:[#allocation4 + $0x190] sm:$0xff]
    %v400 = vld [vmem:[#allocation4 + $0x198] sm:$0xff]
    %v401 = vld [vmem:[#allocation4 + $0x1a0] sm:$0xff]
    %v402 = vld [vmem:[#allocation4 + $0x1a8] sm:$0xff]
    %v403 = vld [vmem:[#allocation4 + $0x1b0] sm:$0xff]
    %v404 = vld [vmem:[#allocation4 + $0x1b8] sm:$0xff]
    %v405 = vld [vmem:[#allocation4 + $0x1c0] sm:$0xff]
    %v406 = vld [vmem:[#allocation4 + $0x1c8] sm:$0xff]
    %v407 = vld [vmem:[#allocation4 + $0x1d0] sm:$0xff]
    %v408 = vld [vmem:[#allocation4 + $0x1d8] sm:$0xff]
    %v409 = vld [vmem:[#allocation4 + $0x1e0] sm:$0xff]
    %v410 = vld [vmem:[#allocation4 + $0x1e8] sm:$0xff]
    %v411 = vld [vmem:[#allocation4 + $0x1f0] sm:$0xff]
    %v412 = vld [vmem:[#allocation4 + $0x1f8] sm:$0xff]
    %v413 = vld [vmem:[%s4] sm:$0x3]
    %v415 = vlaneseq
    %v416 = vshrl.u32 %v415, 7
    %v417 = vsub.s32 0, %v416
    %v418 = vrot.slane %v413, %v417
    %v419 = vlaneseq
    %v420 = vshrl.u32 %v419, 7
    %v421 = vsub.s32 1, %v420
    %v422 = vrot.slane %v413, %v421
    %425 = vmatprep.subr.mxu0 %v350
    %426 = vmatpush1.msra.mxu0 %v349
    %427 = vmatprep.subr.mxu0 %v352
    %428 = vmatpush1.msra.mxu0 %v351
    %429 = vmatprep.subr.mxu0 %v354
    %430 = vmatpush1.msra.mxu0 %v353
    %431 = vmatprep.subr.mxu0 %v356
    %432 = vmatpush1.msra.mxu0 %v355
    %433 = vmatprep.subr.mxu0 %v358
    %434 = vmatpush1.msra.mxu0 %v357
    %435 = vmatprep.subr.mxu0 %v360
    %436 = vmatpush1.msra.mxu0 %v359
    %437 = vmatprep.subr.mxu0 %v362
    %438 = vmatpush1.msra.mxu0 %v361
    %439 = vmatprep.subr.mxu0 %v364
    %440 = vmatpush1.msra.mxu0 %v363
    %441 = vmatprep.subr.mxu0 %v366
    %442 = vmatpush1.msra.mxu0 %v365
    %443 = vmatprep.subr.mxu0 %v368
    %444 = vmatpush1.msra.mxu0 %v367
    %445 = vmatprep.subr.mxu0 %v370
    %446 = vmatpush1.msra.mxu0 %v369
    %447 = vmatprep.subr.mxu0 %v372
    %448 = vmatpush1.msra.mxu0 %v371
    %449 = vmatprep.subr.mxu0 %v374
    %450 = vmatpush1.msra.mxu0 %v373
    %451 = vmatprep.subr.mxu0 %v376
    %452 = vmatpush1.msra.mxu0 %v375
    %453 = vmatprep.subr.mxu0 %v378
    %454 = vmatpush1.msra.mxu0 %v377
    %455 = vmatprep.subr.mxu0 %v380
    %456 = vmatpush1.msra.mxu0 %v379
    %457 = vmatprep.subr.mxu0 %v382
    %458 = vmatpush1.msra.mxu0 %v381
    %459 = vmatprep.subr.mxu0 %v384
    %460 = vmatpush1.msra.mxu0 %v383
    %461 = vmatprep.subr.mxu0 %v386
    %462 = vmatpush1.msra.mxu0 %v385
    %463 = vmatprep.subr.mxu0 %v388
    %464 = vmatpush1.msra.mxu0 %v387
    %465 = vmatprep.subr.mxu0 %v390
    %466 = vmatpush1.msra.mxu0 %v389
    %467 = vmatprep.subr.mxu0 %v392
    %468 = vmatpush1.msra.mxu0 %v391
    %469 = vmatprep.subr.mxu0 %v394
    %470 = vmatpush1.msra.mxu0 %v393
    %471 = vmatprep.subr.mxu0 %v396
    %472 = vmatpush1.msra.mxu0 %v395
    %473 = vmatprep.subr.mxu0 %v398
    %474 = vmatpush1.msra.mxu0 %v397
    %475 = vmatprep.subr.mxu0 %v400
    %476 = vmatpush1.msra.mxu0 %v399
    %477 = vmatprep.subr.mxu0 %v402
    %478 = vmatpush1.msra.mxu0 %v401
    %479 = vmatprep.subr.mxu0 %v404
    %480 = vmatpush1.msra.mxu0 %v403
    %481 = vmatprep.subr.mxu0 %v406
    %482 = vmatpush1.msra.mxu0 %v405
    %483 = vmatprep.subr.mxu0 %v408
    %484 = vmatpush1.msra.mxu0 %v407
    %485 = vmatprep.subr.mxu0 %v410
    %486 = vmatpush1.msra.mxu0 %v409
    %487 = vmatprep.subr.mxu0 %v412
    %488 = vmatpush1.msra.mxu0 %v411
    %489 = vmatprep.mubr.f32.mxu0 %v318
    %490 = vmatmul.mubr.f32.gmra.mrb[0].mxu0 %v317
    %v491 = vpop.f32.mrb[0].mxu0
    %v492 = vadd.f32 %v418, %v491
    %v493 = vpop.f32.mrb[0].mxu0
    %v494 = vadd.f32 %v422, %v493
    %495 = vmatprep.mubr.f32.mxu0 %v320
    %496 = vmatmul.mubr.f32.gmra.mrb[0].mxu0 %v319
    %v497 = vpop.f32.mrb[0].mxu0
    %v498 = vadd.f32 %v418, %v497
    %v499 = vpop.f32.mrb[0].mxu0
    %v500 = vadd.f32 %v422, %v499
    %501 = vmatprep.mubr.f32.mxu0 %v322
    %502 = vmatmul.mubr.f32.gmra.mrb[0].mxu0 %v321
    %v503 = vpop.f32.mrb[0].mxu0
    %v504 = vadd.f32 %v418, %v503
    %v505 = vpop.f32.mrb[0].mxu0
    %v506 = vadd.f32 %v422, %v505
    %507 = vmatprep.mubr.f32.mxu0 %v324
    %508 = vmatmul.mubr.f32.gmra.mrb[0].mxu0 %v323
    %v509 = vpop.f32.mrb[0].mxu0
    %v510 = vadd.f32 %v418, %v509
    %v511 = vpop.f32.mrb[0].mxu0
    %v512 = vadd.f32 %v422, %v511
    %513 = vmatprep.mubr.f32.mxu0 %v326
    %514 = vmatmul.mubr.f32.gmra.mrb[0].mxu0 %v325
    %v515 = vpop.f32.mrb[0].mxu0
    %v516 = vadd.f32 %v418, %v515
    %v517 = vpop.f32.mrb[0].mxu0
    %v518 = vadd.f32 %v422, %v517
    %519 = vmatprep.mubr.f32.mxu0 %v328
    %520 = vmatmul.mubr.f32.gmra.mrb[0].mxu0 %v327
    %v521 = vpop.f32.mrb[0].mxu0
    %v522 = vadd.f32 %v418, %v521
    %v523 = vpop.f32.mrb[0].mxu0
    %v524 = vadd.f32 %v422, %v523
    %525 = vmatprep.mubr.f32.mxu0 %v330
    %526 = vmatmul.mubr.f32.gmra.mrb[0].mxu0 %v329
    %v527 = vpop.f32.mrb[0].mxu0
    %v528 = vadd.f32 %v418, %v527
    %v529 = vpop.f32.mrb[0].mxu0
    %v530 = vadd.f32 %v422, %v529
    %531 = vmatprep.mubr.f32.mxu0 %v332
    %532 = vmatmul.mubr.f32.gmra.mrb[0].mxu0 %v331
    %v533 = vpop.f32.mrb[0].mxu0
    %v534 = vadd.f32 %v418, %v533
    %v535 = vpop.f32.mrb[0].mxu0
    %v536 = vadd.f32 %v422, %v535
    %537 = vmatprep.mubr.f32.mxu0 %v334
    %538 = vmatmul.mubr.f32.gmra.mrb[0].mxu0 %v333
    %v539 = vpop.f32.mrb[0].mxu0
    %v540 = vadd.f32 %v418, %v539
    %v541 = vpop.f32.mrb[0].mxu0
    %v542 = vadd.f32 %v422, %v541
    %543 = vmatprep.mubr.f32.mxu0 %v336
    %544 = vmatmul.mubr.f32.gmra.mrb[0].mxu0 %v335
    %v545 = vpop.f32.mrb[0].mxu0
    %v546 = vadd.f32 %v418, %v545
    %v547 = vpop.f32.mrb[0].mxu0
    %v548 = vadd.f32 %v422, %v547
    %549 = vmatprep.mubr.f32.mxu0 %v338
    %550 = vmatmul.mubr.f32.gmra.mrb[0].mxu0 %v337
    %v551 = vpop.f32.mrb[0].mxu0
    %v552 = vadd.f32 %v418, %v551
    %v553 = vpop.f32.mrb[0].mxu0
    %v554 = vadd.f32 %v422, %v553
    %555 = vmatprep.mubr.f32.mxu0 %v340
    %556 = vmatmul.mubr.f32.gmra.mrb[0].mxu0 %v339
    %v557 = vpop.f32.mrb[0].mxu0
    %v558 = vadd.f32 %v418, %v557
    %v559 = vpop.f32.mrb[0].mxu0
    %v560 = vadd.f32 %v422, %v559
    %561 = vmatprep.mubr.f32.mxu0 %v342
    %562 = vmatmul.mubr.f32.gmra.mrb[0].mxu0 %v341
    %v563 = vpop.f32.mrb[0].mxu0
    %v564 = vadd.f32 %v418, %v563
    %v565 = vpop.f32.mrb[0].mxu0
    %v566 = vadd.f32 %v422, %v565
    %567 = vmatprep.mubr.f32.mxu0 %v344
    %568 = vmatmul.mubr.f32.gmra.mrb[0].mxu0 %v343
    %v569 = vpop.f32.mrb[0].mxu0
    %v570 = vadd.f32 %v418, %v569
    %v571 = vpop.f32.mrb[0].mxu0
    %v572 = vadd.f32 %v422, %v571
    %573 = vmatprep.mubr.f32.mxu0 %v346
    %574 = vmatmul.mubr.f32.gmra.mrb[0].mxu0 %v345
    %v575 = vpop.f32.mrb[0].mxu0
    %v576 = vadd.f32 %v418, %v575
    %v577 = vpop.f32.mrb[0].mxu0
    %v578 = vadd.f32 %v422, %v577
    %579 = vmatprep.mubr.f32.mxu0 %v348
    %580 = vmatmul.mubr.f32.gmra.mrb[0].mxu0 %v347
    %v581 = vpop.f32.mrb[0].mxu0
    %v582 = vadd.f32 %v418, %v581
    %v583 = vpop.f32.mrb[0].mxu0
    %v584 = vadd.f32 %v422, %v583
    %585 = vdwg.mxu0
    %586 = vst [vmem:[%s5] sm:$0xff] %v492
    %587 = vst [vmem:[%s5 + $0x8] sm:$0xff] %v494
    %588 = vst [vmem:[%s5 + $0x10] sm:$0xff] %v498
    %589 = vst [vmem:[%s5 + $0x18] sm:$0xff] %v500
    %590 = vst [vmem:[%s5 + $0x20] sm:$0xff] %v504
    %591 = vst [vmem:[%s5 + $0x28] sm:$0xff] %v506
    %592 = vst [vmem:[%s5 + $0x30] sm:$0xff] %v510
    %593 = vst [vmem:[%s5 + $0x38] sm:$0xff] %v512
    %594 = vst [vmem:[%s5 + $0x40] sm:$0xff] %v516
    %595 = vst [vmem:[%s5 + $0x48] sm:$0xff] %v518
    %596 = vst [vmem:[%s5 + $0x50] sm:$0xff] %v522
    %597 = vst [vmem:[%s5 + $0x58] sm:$0xff] %v524
    %598 = vst [vmem:[%s5 + $0x60] sm:$0xff] %v528
    %599 = vst [vmem:[%s5 + $0x68] sm:$0xff] %v530
    %600 = vst [vmem:[%s5 + $0x70] sm:$0xff] %v534
    %601 = vst [vmem:[%s5 + $0x78] sm:$0xff] %v536
    %602 = vst [vmem:[%s5 + $0x80] sm:$0xff] %v540
    %603 = vst [vmem:[%s5 + $0x88] sm:$0xff] %v542
    %604 = vst [vmem:[%s5 + $0x90] sm:$0xff] %v546
    %605 = vst [vmem:[%s5 + $0x98] sm:$0xff] %v548
    %606 = vst [vmem:[%s5 + $0xa0] sm:$0xff] %v552
    %607 = vst [vmem:[%s5 + $0xa8] sm:$0xff] %v554
    %608 = vst [vmem:[%s5 + $0xb0] sm:$0xff] %v558
    %609 = vst [vmem:[%s5 + $0xb8] sm:$0xff] %v560
    %610 = vst [vmem:[%s5 + $0xc0] sm:$0xff] %v564
    %611 = vst [vmem:[%s5 + $0xc8] sm:$0xff] %v566
    %612 = vst [vmem:[%s5 + $0xd0] sm:$0xff] %v570
    %613 = vst [vmem:[%s5 + $0xd8] sm:$0xff] %v572
    %614 = vst [vmem:[%s5 + $0xe0] sm:$0xff] %v576
    %615 = vst [vmem:[%s5 + $0xe8] sm:$0xff] %v578
    %616 = vst [vmem:[%s5 + $0xf0] sm:$0xff] %v582
    %617 = vst [vmem:[%s5 + $0xf8] sm:$0xff] %v584
    // Predicated region
    $region30: #{_ffn_forward_2d.1} parent=1 // pred_check
      _
    $region31: #{_ffn_forward_2d.1} parent=1 // pred_check_branch
      %619 = sbr.rel (0) target = $region33
    $region32: #{_ffn_forward_2d.1} parent=1 // pred_region
      _
    $region33: #{_ffn_forward_2d.1} parent=1 // pred_fallthru
      _
    // Predicated region
    $region34: #{_ffn_forward_2d.1} parent=1 // pred_check
      _
    $region35: #{_ffn_forward_2d.1} parent=1 // pred_check_branch
      %621 = sbr.rel (0) target = $region37
    $region36: #{_ffn_forward_2d.1} parent=1 // pred_region
      _
    $region37: #{_ffn_forward_2d.1} parent=1 // pred_fallthru
      _
    %622 = vsyncpa [#allocation3], 1
    %623 = vsyncpa [#allocation5], 1

</llo_original>
